<compile_context>
chip_gen: v7x
topology: tpu7x:2x2x1
jax: 0.10.0
libtpu: 0.0.40
codegen_flags: <defaults>
</compile_context>

<pallas_src>
import functools

import jax
import jax.numpy as jnp
from jax import lax
from jax.experimental import pallas as pl
from jax.experimental.pallas import tpu as pltpu


def _round_up(a: int, b: int) -> int:
    return ((a + b - 1) // b) * b


def _cdiv(a: int, b: int) -> int:
    return -(-a // b)


def _vmem_params():
    """(per-input-buffer target bytes, base vmem_limit_bytes), generation-aware."""
    phys = 64 * 1024 * 1024  # conservative default (v7x-sized VMEM)
    get_info = getattr(pltpu, "get_tpu_info", None)
    if get_info is not None:
        try:
            phys = int(getattr(get_info(), "vmem_capacity_bytes", phys))
        except Exception:
            pass
    if phys <= 64 * 1024 * 1024:
        # v7x-class: 64 MiB VMEM, very fast HBM -> big-but-capped blocks.
        return 12 * 1024 * 1024, 48 * 1024 * 1024
    # v5e / v6e: 128 MiB physical VMEM.
    return 16 * 1024 * 1024, 64 * 1024 * 1024


def _mean_dim1_kernel(x_ref, o_ref, *acc, inv_s, ts, valid_last):
    # x_ref: (TB, TS, TH) input tile; o_ref: (TB, TH) resident output block.
    # acc: optional (TB, TH) f32 scratch (omitted when the output is f32 and
    # we can accumulate directly into o_ref).
    acc_ref = acc[0] if acc else o_ref
    k = pl.program_id(2)
    nk = pl.num_programs(2)

    @pl.when(k == 0)
    def _():
        acc_ref[...] = jnp.zeros_like(acc_ref)

    if valid_last == ts:
        # S divides evenly into the S tiles (or a single full-S tile): no mask.
        acc_ref[...] += jnp.sum(x_ref[...], axis=1, dtype=jnp.float32)
    else:
        @pl.when(k < nk - 1)
        def _():
            acc_ref[...] += jnp.sum(x_ref[...], axis=1, dtype=jnp.float32)

        @pl.when(k == nk - 1)
        def _():
            x = x_ref[...]
            keep = lax.broadcasted_iota(jnp.int32, x.shape, 1) < valid_last
            x = jnp.where(keep, x, jnp.zeros_like(x))
            acc_ref[...] += jnp.sum(x, axis=1, dtype=jnp.float32)

    @pl.when(k == nk - 1)
    def _():
        o_ref[...] = (acc_ref[...] * inv_s).astype(o_ref.dtype)


def _mean_dim1(x, max_block_bytes=None):
    B, S, H = x.shape
    dtype = x.dtype

    if B == 0 or S == 0 or H == 0:
        # Degenerate shapes (torch.mean over an empty dim gives NaN); no kernel.
        return jnp.mean(x, axis=1)

    itemsize = jnp.dtype(dtype).itemsize
    pack = max(8, 32 // itemsize)          # native sublane pack: 8 f32 / 16 bf16 / 32 int8
    target, base_limit = _vmem_params()
    if max_block_bytes is not None:        # test / tuning override
        target = int(max_block_bytes)

    # --- H (lane) tile: full H unless even a minimal block would blow the budget.
    TH = H
    if H > 128 and 8 * pack * H * itemsize > target:
        TH = max(128, (target // (8 * pack * itemsize)) // 128 * 128)

    # --- S (reduction, sublane) tile.
    ts_budget = max(pack, (target // (pack * TH * itemsize)) // pack * pack)
    if ts_budget >= S:
        TS = S                              # single reduction step; block dim == full S is legal
        num_k = 1
        # Grow the batch tile (pack multiples) to fill the per-buffer budget.
        tb_budget = max(pack, (target // (TS * TH * itemsize)) // pack * pack)
        TB = min(tb_budget, _round_up(B, 8))
    else:
        TS = ts_budget                      # multiple of the dtype pack
        num_k = _cdiv(S, TS)
        TB = min(pack, _round_up(B, 8))

    # Keep >=2 batch steps when possible so both v7x TensorCores get work.
    if B > 8:
        TB = min(TB, max(8, _round_up(_cdiv(B, 2), 8)))
    TB = max(8, TB)

    valid_last = S - (num_k - 1) * TS       # real rows in the last S tile

    f32_out = jnp.dtype(dtype) == jnp.float32
    scratch = [] if f32_out else [pltpu.VMEM((TB, TH), jnp.float32)]

    # vmem limit: base per generation, raised if this shape actually needs more.
    in_bytes = TB * TS * TH * itemsize
    out_bytes = TB * TH * itemsize
    acc_bytes = 0 if f32_out else TB * TH * 4
    vmem_limit = int(max(base_limit,
                         2 * in_bytes + 2 * out_bytes + acc_bytes + (1 << 20)))

    kernel = functools.partial(_mean_dim1_kernel,
                               inv_s=1.0 / float(S), ts=TS, valid_last=valid_last)

    grid = (_cdiv(B, TB), _cdiv(H, TH), num_k)   # reduction axis last

    return pl.pallas_call(
        kernel,
        out_shape=jax.ShapeDtypeStruct((B, H), dtype),
        grid_spec=pltpu.PrefetchScalarGridSpec(
            num_scalar_prefetch=0,
            grid=grid,
            in_specs=[pl.BlockSpec((TB, TS, TH), lambda i, j, k: (i, k, j))],
            out_specs=pl.BlockSpec((TB, TH), lambda i, j, k: (i, j)),
            scratch_shapes=scratch,
        ),
        compiler_params=pltpu.CompilerParams(
            dimension_semantics=("parallel", "parallel", "arbitrary"),
            vmem_limit_bytes=vmem_limit,
        ),
    )(x)


def mean_featurizer(x, mode="train"):
    """Pallas equivalent of MeanFeaturizer.forward.

    mode='train' and mode='featurize' both compute mean over dim=1;
    any other mode returns x unchanged (matching the PyTorch fallthrough).
    """
    if mode not in ("train", "featurize"):
        return x
    return _mean_dim1(x)


if __name__ == "__main__":
    key = jax.random.PRNGKey(0)
    k1, k2, k3, k4 = jax.random.split(key, 4)

    # 1) Small f32 demo shape consistent with the module: (batch, seq, hidden).
    B, S, H = 2, 8, 32
    x = jax.random.normal(k1, (B, S, H), dtype=jnp.float32)
    out = jax.block_until_ready(mean_featurizer(x, mode="train"))
    ref = jnp.mean(x, axis=1)
    assert out.shape == (B, H) and out.dtype == x.dtype
    assert jnp.allclose(out, ref, atol=1e-5, rtol=1e-5)

    out2 = jax.block_until_ready(mean_featurizer(x, mode="featurize"))
    assert jnp.allclose(out2, ref, atol=1e-5, rtol=1e-5)

    # Fallthrough mode returns x unchanged.
    out3 = mean_featurizer(x, mode="eval")
    assert out3.shape == x.shape

    # 2) Unaligned bf16 shape (ragged batch tile, non-128 hidden) — no host pad.
    B2, S2, H2 = 10, 72, 200
    xb = jax.random.normal(k2, (B2, S2, H2), dtype=jnp.bfloat16)
    outb = jax.block_until_ready(mean_featurizer(xb, mode="train"))
    refb = jnp.mean(xb.astype(jnp.float32), axis=1)
    assert outb.shape == (B2, H2) and outb.dtype == xb.dtype
    assert jnp.allclose(outb.astype(jnp.float32), refb, atol=2e-2, rtol=2e-2)

    # 3) Fully unaligned tiny f32 shape (B, S, H all off the (8,128) grid).
    B3, S3, H3 = 3, 7, 130
    xc = jax.random.normal(k3, (B3, S3, H3), dtype=jnp.float32)
    outc = jax.block_until_ready(mean_featurizer(xc, mode="train"))
    assert jnp.allclose(outc, jnp.mean(xc, axis=1), atol=1e-4, rtol=1e-4)

    # 4) Force the multi-step masked reduction + H-tiling path with a tiny
    #    block budget so it is exercised without large inputs.
    B4, S4, H4 = 4, 100, 256
    xd = jax.random.normal(k4, (B4, S4, H4), dtype=jnp.float32)
    outd = jax.block_until_ready(_mean_dim1(xd, max_block_bytes=32 * 1024))
    assert jnp.allclose(outd, jnp.mean(xd, axis=1), atol=1e-4, rtol=1e-4)

    print("KERNEL_OK")
</pallas_src>

<mosaic_0001>
module attributes {stable_mosaic.version = 11 : i64} {
  func.func @_mean_dim1_kernel(%arg0: i32, %arg1: i32, %arg2: i32, %arg3: memref<8x8x32xf32, #tpu.memory_space<vmem>>, %arg4: memref<8x32xf32, #tpu.memory_space<vmem>>) attributes {dimension_semantics = [#tpu.dimension_semantics<parallel>, #tpu.dimension_semantics<parallel>, #tpu.dimension_semantics<arbitrary>], iteration_bounds = array<i64: 1, 1, 1>, scalar_prefetch = 0 : i64, scratch_operands = 0 : i64, tpu.core_type = #tpu.core_type<tc>, window_params = [{transform_indices = @transform_0, window_bounds = array<i64: 8, 8, 32>}, {transform_indices = @transform_1, window_bounds = array<i64: 8, 32>}]} {
    %c0_i32 = arith.constant 0 : i32
    %0 = arith.cmpi eq, %arg2, %c0_i32 : i32
    %1 = arith.extui %0 : i1 to i32
    %c0_i32_0 = arith.constant 0 : i32
    %2 = arith.cmpi ne, %1, %c0_i32_0 : i32
    scf.if %2 {
      %cst_9 = arith.constant 0.000000e+00 : f32
      %11 = vector.broadcast %cst_9 : f32 to vector<8x32xf32>
      %c0_10 = arith.constant 0 : index
      %c0_11 = arith.constant 0 : index
      %12 = vector.load %arg4[%c0_10, %c0_11] : memref<8x32xf32, #tpu.memory_space<vmem>>, vector<8x32xf32>
      tpu.vector_store %arg4[%c0_10, %c0_11], %11 {strides = array<i32>} : memref<8x32xf32, #tpu.memory_space<vmem>>, vector<8x32xf32>,
    } else {
    }
    %c0 = arith.constant 0 : index
    %c0_1 = arith.constant 0 : index
    %3 = vector.load %arg4[%c0, %c0_1] : memref<8x32xf32, #tpu.memory_space<vmem>>, vector<8x32xf32>
    %c0_2 = arith.constant 0 : index
    %c0_3 = arith.constant 0 : index
    %c0_4 = arith.constant 0 : index
    %4 = vector.load %arg3[%c0_2, %c0_3, %c0_4] : memref<8x8x32xf32, #tpu.memory_space<vmem>>, vector<8x8x32xf32>
    %cst = arith.constant dense<0.000000e+00> : vector<8x32xf32>
    %5 = vector.multi_reduction <add>, %4, %cst [1] : vector<8x8x32xf32> to vector<8x32xf32>
    %6 = arith.addf %3, %5 : vector<8x32xf32>
    %c0_5 = arith.constant 0 : index
    %c0_6 = arith.constant 0 : index
    %7 = vector.load %arg4[%c0_5, %c0_6] : memref<8x32xf32, #tpu.memory_space<vmem>>, vector<8x32xf32>
    tpu.vector_store %arg4[%c0_5, %c0_6], %6 {strides = array<i32>} : memref<8x32xf32, #tpu.memory_space<vmem>>, vector<8x32xf32>,
    %c0_i32_7 = arith.constant 0 : i32
    %8 = arith.cmpi eq, %arg2, %c0_i32_7 : i32
    %9 = arith.extui %8 : i1 to i32
    %c0_i32_8 = arith.constant 0 : i32
    %10 = arith.cmpi ne, %9, %c0_i32_8 : i32
    scf.if %10 {
      %c0_9 = arith.constant 0 : index
      %c0_10 = arith.constant 0 : index
      %11 = vector.load %arg4[%c0_9, %c0_10] : memref<8x32xf32, #tpu.memory_space<vmem>>, vector<8x32xf32>
      %cst_11 = arith.constant 1.250000e-01 : f32
      %12 = vector.broadcast %cst_11 : f32 to vector<8x32xf32>
      %13 = arith.mulf %11, %12 : vector<8x32xf32>
      %c0_12 = arith.constant 0 : index
      %c0_13 = arith.constant 0 : index
      %14 = vector.load %arg4[%c0_12, %c0_13] : memref<8x32xf32, #tpu.memory_space<vmem>>, vector<8x32xf32>
      tpu.vector_store %arg4[%c0_12, %c0_13], %13 {strides = array<i32>} : memref<8x32xf32, #tpu.memory_space<vmem>>, vector<8x32xf32>,
    } else {
    }
    return
  }
  func.func @transform_0(%arg0: i32, %arg1: i32, %arg2: i32) -> (i32, i32, i32) {
    %c0_i32 = arith.constant 0 : i32
    return %arg0, %arg2, %arg1 : i32, i32, i32
  }
  func.func @transform_1(%arg0: i32, %arg1: i32, %arg2: i32) -> (i32, i32) {
    %c0_i32 = arith.constant 0 : i32
    return %arg0, %arg1 : i32, i32
  }
}

</mosaic_0001>

<llo_original>
// kernel: tpu_custom_call.1
$region0: #{tpu_custom_call.1}
  #allocation0 [shape = 'u32[]', space=smem, size = 0x4, offset = 0x4, fixed_abs, tag = 'smem constant byte address 0x4 - core index']
  #allocation1 [shape = 'u32[144,128]{1,0:T(1,128)}', space=vmem, size = 0x12000, scoped, tag = 'internal scratch']
  %s0 = inlined_call_operand.hbm [shape: f32[2,8,32], index: 0, kind: input, shape index: {}]
  %s1 = inlined_call_operand.hbm [shape: f32[2,32], index: 1, kind: output, shape index: {}]
  %s2 = sld [smem:[#allocation0]]
  $region26: #{tpu_custom_call.1} parent=0
    _
  %s4 = ssub.s32 1, %s2
  %s5 = scalar_select 0, %s4, %s2
  $region1: #{tpu_custom_call.1} parent=0
    #allocation2 [shape = 'u8[32768]{0}', space=vmem, size = 0x8000, scoped, tag = 'input window, operand 0, single buffered']
    #allocation3 [shape = 's32[1]{0}', space=sflag, size = 0x4, scoped, tag = 'scoped memory for tpu_custom_call.1']
    #allocation4 [shape = 's32[1]{0}', space=sflag, size = 0x4, scoped, tag = 'scoped memory for tpu_custom_call.1']
    #allocation5 [shape = 'u8[4096]{0}', space=vmem, size = 0x1000, scoped, tag = 'output window, operand 0, single buffered']
    %6 = vsyncpa [#allocation3], 0
    %7 = vsyncpa [#allocation4], 0
    // Predicated region
    $region2: #{tpu_custom_call.1} parent=1 // pred_check
      _
    $region3: #{tpu_custom_call.1} parent=1 // pred_check_branch
      %9 = sbr.rel (0) target = $region5
    $region4: #{tpu_custom_call.1} parent=1 // pred_region
      %s11 = ssub.s32 1024, 256
      %12 = vsyncadd [#allocation3], %s11
      %s13 = sshll.u32 [#allocation2], 4
      %s14 = int_to_ptr.vmem [resolvable:$true] %s13
      %19 = dma.hbm_to_vmem [thread:$0]  %s0, 256, %s14, [#allocation3], 128, 128, 8
    $region5: #{tpu_custom_call.1} parent=1 // pred_fallthru
      _
    // Predicated region
    $region6: #{tpu_custom_call.1} parent=1 // pred_check
      _
    $region7: #{tpu_custom_call.1} parent=1 // pred_check_branch
      %21 = sbr.rel (0) target = $region9
    $region8: #{tpu_custom_call.1} parent=1 // pred_region
      %22 = dma.done [#allocation3], 1024
    $region9: #{tpu_custom_call.1} parent=1 // pred_fallthru
      _
    %p23 = scmp.eq.s32.totalorder 0, 0
    // Predicated region
    $region10: #{tpu_custom_call.1} parent=1 // pred_check
      %p24 = pneg %p23
    $region11: #{tpu_custom_call.1} parent=1 // pred_check_branch
      %26 = sbr.rel (%p24) target = $region13
    $region12: #{tpu_custom_call.1} parent=1 // pred_region
      %vm27 = vcmask 261120
      %28 = vst.msk [vmem:[#allocation5] sm:$0xff] %vm27, 0.0
    $region13: #{tpu_custom_call.1} parent=1 // pred_fallthru
      _
    %v29 = vld [vmem:[#allocation5] sm:$0xff]
    %v30 = vld [vmem:[#allocation2] sm:$0xff]
    %v31 = vld [vmem:[#allocation2 + $0x8] sm:$0xff]
    %v32 = vld [vmem:[#allocation2 + $0x10] sm:$0xff]
    %v33 = vld [vmem:[#allocation2 + $0x18] sm:$0xff]
    %v34 = vld [vmem:[#allocation2 + $0x20] sm:$0xff]
    %v35 = vld [vmem:[#allocation2 + $0x28] sm:$0xff]
    %v36 = vld [vmem:[#allocation2 + $0x30] sm:$0xff]
    %v37 = vld [vmem:[#allocation2 + $0x38] sm:$0xff]
    %vm38 = vcmask 261120
    %v39 = vsel %vm38, %v30, 0.0
    %v40 = vrot.slane %v39, 4
    %v41 = vadd.f32 %v39, %v40
    %v42 = vrot.slane %v41, 2
    %v43 = vadd.f32 %v41, %v42
    %v44 = vrot.slane %v43, 1
    %v45 = vadd.f32 %v43, %v44
    %v46 = vsel %vm38, %v31, 0.0
    %v47 = vrot.slane %v46, 4
    %v48 = vadd.f32 %v46, %v47
    %v49 = vrot.slane %v48, 2
    %v50 = vadd.f32 %v48, %v49
    %v51 = vrot.slane %v50, 1
    %v52 = vadd.f32 %v50, %v51
    %v53 = vsel %vm38, %v32, 0.0
    %v54 = vrot.slane %v53, 4
    %v55 = vadd.f32 %v53, %v54
    %v56 = vrot.slane %v55, 2
    %v57 = vadd.f32 %v55, %v56
    %v58 = vrot.slane %v57, 1
    %v59 = vadd.f32 %v57, %v58
    %v60 = vsel %vm38, %v33, 0.0
    %v61 = vrot.slane %v60, 4
    %v62 = vadd.f32 %v60, %v61
    %v63 = vrot.slane %v62, 2
    %v64 = vadd.f32 %v62, %v63
    %v65 = vrot.slane %v64, 1
    %v66 = vadd.f32 %v64, %v65
    %v67 = vsel %vm38, %v34, 0.0
    %v68 = vrot.slane %v67, 4
    %v69 = vadd.f32 %v67, %v68
    %v70 = vrot.slane %v69, 2
    %v71 = vadd.f32 %v69, %v70
    %v72 = vrot.slane %v71, 1
    %v73 = vadd.f32 %v71, %v72
    %v74 = vsel %vm38, %v35, 0.0
    %v75 = vrot.slane %v74, 4
    %v76 = vadd.f32 %v74, %v75
    %v77 = vrot.slane %v76, 2
    %v78 = vadd.f32 %v76, %v77
    %v79 = vrot.slane %v78, 1
    %v80 = vadd.f32 %v78, %v79
    %v81 = vsel %vm38, %v36, 0.0
    %v82 = vrot.slane %v81, 4
    %v83 = vadd.f32 %v81, %v82
    %v84 = vrot.slane %v83, 2
    %v85 = vadd.f32 %v83, %v84
    %v86 = vrot.slane %v85, 1
    %v87 = vadd.f32 %v85, %v86
    %v88 = vsel %vm38, %v37, 0.0
    %v89 = vrot.slane %v88, 4
    %v90 = vadd.f32 %v88, %v89
    %v91 = vrot.slane %v90, 2
    %v92 = vadd.f32 %v90, %v91
    %v93 = vrot.slane %v92, 1
    %v94 = vadd.f32 %v92, %v93
    %vm103 = vcmask 1041409
    %v104 = vsel %vm103, %v52, %v45
    %vm105 = vcmask 1042434
    %v106 = vsel %vm105, %v59, %v104
    %vm107 = vcmask 1043459
    %v108 = vsel %vm107, %v66, %v106
    %vm109 = vcmask 1044484
    %v110 = vsel %vm109, %v73, %v108
    %vm111 = vcmask 1045509
    %v112 = vsel %vm111, %v80, %v110
    %vm113 = vcmask 1046534
    %v114 = vsel %vm113, %v87, %v112
    %vm115 = vcmask 1047559
    %v116 = vsel %vm115, %v94, %v114
    %v118 = vadd.f32 %v29, %v116
    %119 = vst.msk [vmem:[#allocation5] sm:$0xff] %vm38, %v118
    // Predicated region
    $region14: #{tpu_custom_call.1} parent=1 // pred_check
      %p120 = pneg %p23
    $region15: #{tpu_custom_call.1} parent=1 // pred_check_branch
      %122 = sbr.rel (%p120) target = $region17
    $region16: #{tpu_custom_call.1} parent=1 // pred_region
      %v123 = vld [vmem:[#allocation5] sm:$0xff]
      %v124 = vmul.f32 %v123, 0.125
      %125 = vst.msk [vmem:[#allocation5] sm:$0xff] %vm38, %v124
    $region17: #{tpu_custom_call.1} parent=1 // pred_fallthru
      _
    // Predicated region
    $region18: #{tpu_custom_call.1} parent=1 // pred_check
      _
    $region19: #{tpu_custom_call.1} parent=1 // pred_check_branch
      %127 = sbr.rel (0) target = $region21
    $region20: #{tpu_custom_call.1} parent=1 // pred_region
      %s129 = ssub.s32 128, 32
      %130 = vsyncadd [#allocation4], %s129
      %s131 = sshll.u32 [#allocation5], 4
      %s132 = int_to_ptr.vmem [resolvable:$true] %s131
      %137 = dma.vmem_to_hbm [thread:$0]  %s132, 32, %s1, [#allocation4], 32, 32, 2
    $region21: #{tpu_custom_call.1} parent=1 // pred_fallthru
      _
    // Predicated region
    $region22: #{tpu_custom_call.1} parent=1 // pred_check
      _
    $region23: #{tpu_custom_call.1} parent=1 // pred_check_branch
      %139 = sbr.rel (0) target = $region25
    $region24: #{tpu_custom_call.1} parent=1 // pred_region
      %140 = dma.done [#allocation4], 128
    $region25: #{tpu_custom_call.1} parent=1 // pred_fallthru
      _
    %141 = vsyncpa [#allocation3], 1
    %142 = vsyncpa [#allocation4], 1

</llo_original>
